<compile_context>
chip_gen: v5e
topology: v5e:2x2
jax: 0.10.0
libtpu: 0.0.40
codegen_flags: <defaults>
</compile_context>

<pallas_src>
import jax
import jax.numpy as jnp
from jax import lax
from jax.experimental import pallas as pl
from jax.experimental.pallas import tpu as pltpu

LANE = 128  # TPU lane width; channel dims padded to multiples of this.


# --------------------------------------------------------------------------
# small helpers
# --------------------------------------------------------------------------
def _round_up(x, m):
    return (x + m - 1) // m * m


def _pad_last(a, to):
    pad = to - a.shape[-1]
    if pad == 0:
        return a
    cfg = [(0, 0)] * (a.ndim - 1) + [(0, pad)]
    return jnp.pad(a, cfg)


def _pad_rows(a, rows):
    if a.shape[0] == rows:
        return a
    return jnp.pad(a, ((0, rows - a.shape[0]), (0, 0)))


def _pick_tile(m, tm_max=512):
    """Pick the M tile (multiple of 128, as large as sensible) and padded M.

    tm_max=512 keeps the double-buffered (x tile + out tile + weight) working
    set well under the 32 MiB default scoped-VMEM even for 2048-channel ResNet
    layers, so it is also safe on v7x's 64 MiB physical VMEM.
    """
    mp = _round_up(m, LANE)
    tm = min(tm_max, mp)
    # Prefer >= 2 parallel grid steps so v7x's two TensorCores both get work.
    if mp > LANE and mp // tm < 2:
        tm = _round_up(mp // 2, LANE)
    mp = _round_up(mp, tm)
    return tm, mp


# --------------------------------------------------------------------------
# Pallas kernel 1: fused 1x1-conv matmul + bias + (residual | 2nd matmul) + ReLU
# --------------------------------------------------------------------------
def _mm_kernel(mode):
    if mode == "plain":
        def kernel(x_ref, w_ref, b_ref, o_ref):
            acc = jnp.dot(x_ref[...], w_ref[...],
                          preferred_element_type=jnp.float32)
            o_ref[...] = jnp.maximum(acc + b_ref[...], 0.0).astype(o_ref.dtype)
    elif mode == "residual":
        def kernel(x_ref, w_ref, r_ref, b_ref, o_ref):
            acc = jnp.dot(x_ref[...], w_ref[...],
                          preferred_element_type=jnp.float32)
            acc = acc + r_ref[...].astype(jnp.float32)
            o_ref[...] = jnp.maximum(acc + b_ref[...], 0.0).astype(o_ref.dtype)
    else:  # "dual": conv3 matmul + downsample-shortcut matmul fused
        def kernel(x_ref, w_ref, x2_ref, w2_ref, b_ref, o_ref):
            acc = jnp.dot(x_ref[...], w_ref[...],
                          preferred_element_type=jnp.float32)
            acc = acc + jnp.dot(x2_ref[...], w2_ref[...],
                                preferred_element_type=jnp.float32)
            o_ref[...] = jnp.maximum(acc + b_ref[...], 0.0).astype(o_ref.dtype)
    return kernel


def fused_conv1x1(x, w, bias, *, residual=None, x2=None, w2=None,
                  out_dtype=jnp.bfloat16, tm_max=512):
    """relu( x @ w + [x2 @ w2] + [residual] + bias ).

    x: (M, K); w: (K, C) with BN scale pre-folded; bias: (C,) f32.
    K, C (and K2) must already be padded to multiples of 128 by the caller.
    Matmul operands are cast to bf16; accumulation is f32 on the MXU.
    """
    M, K = x.shape
    C = w.shape[1]
    tm, Mp = _pick_tile(M, tm_max)

    args = [_pad_rows(x.astype(jnp.bfloat16), Mp), w.astype(jnp.bfloat16)]
    in_specs = [pl.BlockSpec((tm, K), lambda i: (i, 0)),
                pl.BlockSpec((K, C), lambda i: (0, 0))]
    flops = 2 * M * K * C
    out_bytes = 2 if out_dtype == jnp.bfloat16 else 4
    bytes_acc = Mp * K * 2 + K * C * 2 + Mp * C * out_bytes

    if x2 is not None:
        mode = "dual"
        K2 = x2.shape[1]
        args += [_pad_rows(x2.astype(jnp.bfloat16), Mp), w2.astype(jnp.bfloat16)]
        in_specs += [pl.BlockSpec((tm, K2), lambda i: (i, 0)),
                     pl.BlockSpec((K2, C), lambda i: (0, 0))]
        flops += 2 * M * K2 * C
        bytes_acc += Mp * K2 * 2 + K2 * C * 2
    elif residual is not None:
        mode = "residual"
        args += [_pad_rows(residual.astype(jnp.bfloat16), Mp)]
        in_specs += [pl.BlockSpec((tm, C), lambda i: (i, 0))]
        bytes_acc += Mp * C * 2
    else:
        mode = "plain"

    args.append(bias.reshape(1, C).astype(jnp.float32))
    in_specs.append(pl.BlockSpec((1, C), lambda i: (0, 0)))

    out = pl.pallas_call(
        _mm_kernel(mode),
        out_shape=jax.ShapeDtypeStruct((Mp, C), out_dtype),
        grid=(Mp // tm,),
        in_specs=in_specs,
        out_specs=pl.BlockSpec((tm, C), lambda i: (i, 0)),
        compiler_params=pltpu.CompilerParams(
            dimension_semantics=("parallel",)),
        cost_estimate=pl.CostEstimate(flops=int(flops), transcendentals=0,
                                      bytes_accessed=int(bytes_acc)),
    )(*args)
    return out[:M]


# --------------------------------------------------------------------------
# Pallas kernel 2: fused 3x3 conv + bias + ReLU (in-kernel tap accumulation)
# --------------------------------------------------------------------------
def _make_conv3x3_kernel(TH, stride, Wo, Cout):
    def kernel(x_ref, w_ref, b_ref, o_ref):
        # x_ref: (1, Hp, S, Wc, C)  padded input, columns split by stride parity
        # w_ref: (9, C, Cout)       BN-scale-folded taps, bf16
        # b_ref: (1, Cout) f32      folded BN bias
        # o_ref: (1, TH, Wo, Cout)  bf16 output rows for this grid step
        rb = pl.program_id(1)
        bias = b_ref[...]
        for th in range(TH):                       # unrolled output rows
            i = rb * TH + th
            acc = jnp.zeros((Wo, Cout), jnp.float32)
            for ky in range(3):
                rows = x_ref[0, i * stride + ky]   # (S, Wc, C)
                for kx in range(3):
                    p, off = kx % stride, kx // stride
                    tap = rows[p, off:off + Wo, :]             # (Wo, C) bf16
                    acc = acc + jnp.dot(tap, w_ref[3 * ky + kx],
                                        preferred_element_type=jnp.float32)
            o_ref[0, th] = jnp.maximum(acc + bias, 0.0).astype(o_ref.dtype)
    return kernel


def conv3x3_bn_relu(x, w9, bias, stride):
    """x: (N, H, W, C) bf16 (C padded to 128); w9: (9, C, Cout) bf16;
    bias: (Cout,) f32.  Returns ((N, Ho, Wo, Cout) bf16, Ho, Wo).

    The 3x3 taps are accumulated inside the kernel (no 9x im2col buffer in
    HBM).  Stride is handled by splitting the padded input columns into
    stride-parity banks so every in-kernel slice is contiguous.
    """
    N, H, W, C = x.shape
    Cout = w9.shape[-1]
    S = stride
    Ho = (H - 1) // S + 1
    Wo = (W - 1) // S + 1
    Hp, Wp = H + 2, W + 2

    xp = jnp.pad(x, ((0, 0), (1, 1), (1, 1), (0, 0)))
    Wc = (Wp + S - 1) // S
    banks = []
    for p in range(S):
        b = xp[:, :, p::S, :]
        if b.shape[2] < Wc:
            b = jnp.pad(b, ((0, 0), (0, 0), (0, Wc - b.shape[2]), (0, 0)))
        banks.append(b)
    xb = jnp.stack(banks, axis=2)                  # (N, Hp, S, Wc, C) bf16

    TH = next(t for t in (8, 4, 2, 1) if Ho % t == 0)
    flops = 2 * N * Ho * Wo * 9 * C * Cout
    bytes_acc = xb.size * 2 + w9.size * 2 + N * Ho * Wo * Cout * 2

    out = pl.pallas_call(
        _make_conv3x3_kernel(TH, S, Wo, Cout),
        out_shape=jax.ShapeDtypeStruct((N, Ho, Wo, Cout), jnp.bfloat16),
        grid=(N, Ho // TH),
        in_specs=[
            pl.BlockSpec((1, Hp, S, Wc, C), lambda n, r: (n, 0, 0, 0, 0)),
            pl.BlockSpec((9, C, Cout), lambda n, r: (0, 0, 0)),
            pl.BlockSpec((1, Cout), lambda n, r: (0, 0)),
        ],
        out_specs=pl.BlockSpec((1, TH, Wo, Cout), lambda n, r: (n, r, 0, 0)),
        compiler_params=pltpu.CompilerParams(
            dimension_semantics=("parallel", "arbitrary")),
        cost_estimate=pl.CostEstimate(flops=int(flops), transcendentals=0,
                                      bytes_accessed=int(bytes_acc)),
    )(xb, w9, bias.reshape(1, Cout).astype(jnp.float32))
    return out, Ho, Wo


# --------------------------------------------------------------------------
# BN folding / parameter prep (weights are static: fold BN scale into them)
# --------------------------------------------------------------------------
def bn_fold(gamma, beta, mean, var, eps=1e-5):
    scale = gamma / jnp.sqrt(var + eps)
    return scale, beta - mean * scale


def fold_conv1x1(w_pt, bn, kp, cp):
    """w_pt: (Cout, Cin, 1, 1) -> ((kp, cp) bf16 scale-folded weight, (cp,) f32 bias)."""
    cout, cin = w_pt.shape[0], w_pt.shape[1]
    scale, bias = bn_fold(**bn)
    w = w_pt.reshape(cout, cin).T * scale[None, :]
    w = jnp.pad(w, ((0, kp - cin), (0, cp - cout))).astype(jnp.bfloat16)
    b = jnp.pad(bias, (0, cp - cout)).astype(jnp.float32)
    return w, b


def fold_conv3x3(w_pt, bn, kp, cp):
    """w_pt: (Cout, Cin, 3, 3) -> ((9, kp, cp) bf16 taps, (cp,) f32 bias)."""
    cout, cin = w_pt.shape[0], w_pt.shape[1]
    scale, bias = bn_fold(**bn)
    w = jnp.transpose(w_pt, (2, 3, 1, 0)).reshape(9, cin, cout)
    w = w * scale[None, None, :]
    w = jnp.pad(w, ((0, 0), (0, kp - cin), (0, cp - cout))).astype(jnp.bfloat16)
    b = jnp.pad(bias, (0, cp - cout)).astype(jnp.float32)
    return w, b


def init_params(key, in_planes, planes, stride, expansion=4):
    cout = expansion * planes
    keys = jax.random.split(key, 20)
    k = iter(keys)

    def conv(kk, shape):
        fan_in = shape[1] * shape[2] * shape[3]
        return (jax.random.normal(kk, shape, jnp.float32) /
                jnp.sqrt(jnp.float32(fan_in)))

    def bn(k0, k1, k2, k3, c):
        return dict(
            gamma=1.0 + 0.1 * jax.random.normal(k0, (c,), jnp.float32),
            beta=0.1 * jax.random.normal(k1, (c,), jnp.float32),
            mean=0.1 * jax.random.normal(k2, (c,), jnp.float32),
            var=0.5 + jax.random.uniform(k3, (c,), jnp.float32),
        )

    p = {
        "w1": conv(next(k), (planes, in_planes, 1, 1)),
        "bn1": bn(next(k), next(k), next(k), next(k), planes),
        "w2": conv(next(k), (planes, planes, 3, 3)),
        "bn2": bn(next(k), next(k), next(k), next(k), planes),
        "w3": conv(next(k), (cout, planes, 1, 1)),
        "bn3": bn(next(k), next(k), next(k), next(k), cout),
    }
    if stride != 1 or in_planes != cout:
        p["ws"] = conv(next(k), (cout, in_planes, 1, 1))
        p["bns"] = bn(next(k), next(k), next(k), next(k), cout)
    return p


# --------------------------------------------------------------------------
# Bottleneck forward (Pallas) and pure-XLA reference
# --------------------------------------------------------------------------
def bottleneck_forward(x_nchw, params, stride, expansion=4):
    x = jnp.transpose(x_nchw, (0, 2, 3, 1))            # NHWC, f32
    N, H, W, Cin = x.shape
    planes = params["w1"].shape[0]
    cout = expansion * planes
    cin_p = _round_up(Cin, LANE)
    pln_p = _round_up(planes, LANE)
    co_p = _round_up(cout, LANE)

    xb = _pad_last(x, cin_p).astype(jnp.bfloat16)      # (N, H, W, cin_p)

    # Fold BN scale into weight columns (one-time, trace-level transform).
    # TODO(synk): on v7x the folded weights could additionally be quantized to
    # fp8 with a per-channel dequant folded into the bias path.
    w1, b1 = fold_conv1x1(params["w1"], params["bn1"], cin_p, pln_p)
    w2, b2 = fold_conv3x3(params["w2"], params["bn2"], pln_p, pln_p)
    w3, b3 = fold_conv1x1(params["w3"], params["bn3"], pln_p, co_p)

    # conv1 (1x1) + bn1 + relu
    out1 = fused_conv1x1(xb.reshape(-1, cin_p), w1, b1,
                         out_dtype=jnp.bfloat16)
    out1 = out1.reshape(N, H, W, pln_p)

    # conv2 (3x3, stride, pad=1) + bn2 + relu (in-kernel taps, no im2col)
    out2, Ho, Wo = conv3x3_bn_relu(out1, w2, b2, stride)
    M3 = N * Ho * Wo

    # conv3 (1x1) + bn3 + shortcut + relu, all in one kernel
    if stride != 1 or Cin != cout:
        ws, bs = fold_conv1x1(params["ws"], params["bns"], cin_p, co_p)
        xs = xb[:, ::stride, ::stride, :].reshape(M3, cin_p)
        out3 = fused_conv1x1(out2.reshape(M3, pln_p), w3, b3 + bs,
                             x2=xs, w2=ws, out_dtype=jnp.float32)
    else:  # identity shortcut: cin_p == co_p
        out3 = fused_conv1x1(out2.reshape(M3, pln_p), w3, b3,
                             residual=xb.reshape(M3, cin_p),
                             out_dtype=jnp.float32)

    out = out3.reshape(N, Ho, Wo, co_p)[..., :cout]
    return jnp.transpose(out, (0, 3, 1, 2))            # back to NCHW


def bottleneck_reference(x_nchw, params, stride, expansion=4):
    """Pure-XLA f32 reference (for correctness checking only)."""
    x = jnp.transpose(x_nchw, (0, 2, 3, 1)).astype(jnp.float32)

    def conv(v, w_pt, s, pad):
        w = jnp.transpose(w_pt, (2, 3, 1, 0))          # HWIO
        return lax.conv_general_dilated(
            v, w, (s, s), pad, dimension_numbers=("NHWC", "HWIO", "NHWC"))

    def bn(v, p):
        s, b = bn_fold(**p)
        return v * s + b

    out = jax.nn.relu(bn(conv(x, params["w1"], 1, "VALID"), params["bn1"]))
    out = jax.nn.relu(bn(conv(out, params["w2"], stride, [(1, 1), (1, 1)]),
                         params["bn2"]))
    out = bn(conv(out, params["w3"], 1, "VALID"), params["bn3"])
    if "ws" in params:
        sc = bn(conv(x, params["ws"], stride, "VALID"), params["bns"])
    else:
        sc = x
    out = jax.nn.relu(out + sc)
    return jnp.transpose(out, (0, 3, 1, 2))


# --------------------------------------------------------------------------
if __name__ == "__main__":
    key = jax.random.PRNGKey(0)
    k1, k2, k3, k4 = jax.random.split(key, 4)

    def check(y, y_ref):
        assert bool(jnp.all(y >= 0.0))                 # post-ReLU
        err = float(jnp.max(jnp.abs(y.astype(jnp.float32) - y_ref)))
        scale = float(jnp.max(jnp.abs(y_ref)))
        assert err <= 0.05 * scale + 0.05, (err, scale)

    # Case 1: stride-2 downsample block (dual-matmul fused shortcut path).
    N, in_planes, H, W = 2, 4, 16, 16
    planes, stride = 4, 2
    x = jax.random.normal(k1, (N, in_planes, H, W), jnp.float32)
    params = init_params(k2, in_planes, planes, stride)
    y = jax.block_until_ready(bottleneck_forward(x, params, stride))
    expected = (N, 4 * planes, (H - 1) // stride + 1, (W - 1) // stride + 1)
    assert y.shape == expected, (y.shape, expected)
    check(y, bottleneck_reference(x, params, stride))

    # Case 2: stride-1 identity-shortcut block (fused residual-add path).
    in_planes2, planes2, stride2 = 16, 4, 1
    x2 = jax.random.normal(k3, (N, in_planes2, H, W), jnp.float32)
    params2 = init_params(k4, in_planes2, planes2, stride2)
    y2 = jax.block_until_ready(bottleneck_forward(x2, params2, stride2))
    assert y2.shape == (N, 4 * planes2, H, W), y2.shape
    check(y2, bottleneck_reference(x2, params2, stride2))

    print("KERNEL_OK")
</pallas_src>

<mosaic_0001>
module attributes {stable_mosaic.version = 11 : i64} {
  func.func @kernel(%arg0: i32, %arg1: memref<256x128xbf16, #tpu.memory_space<vmem>>, %arg2: memref<128x128xbf16, #tpu.memory_space<vmem>>, %arg3: memref<1x128xf32, #tpu.memory_space<vmem>>, %arg4: memref<256x128xbf16, #tpu.memory_space<vmem>>) attributes {dimension_semantics = [#tpu.dimension_semantics<parallel>], iteration_bounds = array<i64: 2>, scalar_prefetch = 0 : i64, scratch_operands = 0 : i64, tpu.core_type = #tpu.core_type<tc>, window_params = [{transform_indices = @transform_0, window_bounds = array<i64: 256, 128>}, {pipeline_mode = #tpu.pipeline_mode<synchronous>, transform_indices = @transform_1, window_bounds = array<i64: 128, 128>}, {pipeline_mode = #tpu.pipeline_mode<synchronous>, transform_indices = @transform_2, window_bounds = array<i64: 1, 128>}, {transform_indices = @transform_3, window_bounds = array<i64: 256, 128>}]} {
    %c0 = arith.constant 0 : index
    %c0_0 = arith.constant 0 : index
    %0 = vector.load %arg1[%c0, %c0_0] : memref<256x128xbf16, #tpu.memory_space<vmem>>, vector<256x128xbf16>
    %c0_1 = arith.constant 0 : index
    %c0_2 = arith.constant 0 : index
    %1 = vector.load %arg2[%c0_1, %c0_2] : memref<128x128xbf16, #tpu.memory_space<vmem>>, vector<128x128xbf16>
    %cst = arith.constant dense<0.000000e+00> : vector<256x128xf32>
    %2 = tpu.matmul %0, %1, %cst {dimension_numbers = #tpu.dot_dimension_numbers<[1], [0], [0], [1], [0, 0, 1, 1], [], []>} : vector<256x128xbf16>, vector<128x128xbf16>, vector<256x128xf32> -> vector<256x128xf32>
    %c0_3 = arith.constant 0 : index
    %c0_4 = arith.constant 0 : index
    %3 = vector.load %arg3[%c0_3, %c0_4] : memref<1x128xf32, #tpu.memory_space<vmem>>, vector<1x128xf32>
    %4 = vector.broadcast %3 : vector<1x128xf32> to vector<256x128xf32>
    %5 = arith.addf %2, %4 : vector<256x128xf32>
    %cst_5 = arith.constant 0.000000e+00 : f32
    %6 = vector.broadcast %cst_5 : f32 to vector<256x128xf32>
    %7 = arith.maximumf %5, %6 : vector<256x128xf32>
    %8 = arith.truncf %7 : vector<256x128xf32> to vector<256x128xbf16>
    %c0_6 = arith.constant 0 : index
    %c0_7 = arith.constant 0 : index
    %9 = vector.load %arg4[%c0_6, %c0_7] : memref<256x128xbf16, #tpu.memory_space<vmem>>, vector<256x128xbf16>
    tpu.vector_store %arg4[%c0_6, %c0_7], %8 {strides = array<i32>} : memref<256x128xbf16, #tpu.memory_space<vmem>>, vector<256x128xbf16>,
    return
  }
  func.func @transform_0(%arg0: i32) -> (i32, i32) {
    %c0_i32 = arith.constant 0 : i32
    %c0_i32_0 = arith.constant 0 : i32
    return %arg0, %c0_i32 : i32, i32
  }
  func.func @transform_1(%arg0: i32) -> (i32, i32) {
    %c0_i32 = arith.constant 0 : i32
    %c0_i32_0 = arith.constant 0 : i32
    %c0_i32_1 = arith.constant 0 : i32
    return %c0_i32, %c0_i32_0 : i32, i32
  }
  func.func @transform_2(%arg0: i32) -> (i32, i32) {
    %c0_i32 = arith.constant 0 : i32
    %c0_i32_0 = arith.constant 0 : i32
    %c0_i32_1 = arith.constant 0 : i32
    return %c0_i32, %c0_i32_0 : i32, i32
  }
  func.func @transform_3(%arg0: i32) -> (i32, i32) {
    %c0_i32 = arith.constant 0 : i32
    %c0_i32_0 = arith.constant 0 : i32
    return %arg0, %c0_i32 : i32, i32
  }
}

</mosaic_0001>

<llo_original>
// kernel: tpu_custom_call.1
$region0: #{tpu_custom_call.1}
  #allocation0 [shape = 'u32[]', space=smem, size = 0x4, offset = 0x4, fixed_abs, tag = 'smem constant byte address 0x4 - core index']
  #allocation1 [shape = 'u32[72,128]{1,0:T(1,128)}', space=vmem, size = 0x9000, scoped, tag = 'internal scratch']
  %s0 = inlined_call_operand.hbm [shape: bf16[512,128], index: 0, kind: input, shape index: {}]
  %s1 = inlined_call_operand.hbm [shape: bf16[128,128], index: 1, kind: input, shape index: {}]
  %s2 = inlined_call_operand.vmem [shape: f32[1,128], index: 2, kind: input, shape index: {}]
  %s3 = inlined_call_operand.hbm [shape: bf16[512,128], index: 3, kind: output, shape index: {}]
  %s4 = sld [smem:[#allocation0]]
  $region53: #{tpu_custom_call.1} parent=0
    _
  %s6 = ssub.s32 1, %s4
  %s7 = scalar_select 0, %s6, %s4
  $region1: #{tpu_custom_call.1} parent=0
    #allocation2 [shape = 'u8[131072]{0}', space=vmem, size = 0x20000, scoped, tag = 'input window, operand 0']
    #allocation3 [shape = 's32[2]{0}', space=sflag, size = 0x8, scoped, tag = 'scoped memory for tpu_custom_call.1']
    #allocation4 [shape = 's32[2]{0}', space=sflag, size = 0x8, scoped, tag = 'scoped memory for tpu_custom_call.1']
    #allocation5 [shape = 'u8[32768]{0}', space=vmem, size = 0x8000, scoped, tag = 'input window, operand 1, single buffered']
    #allocation6 [shape = 's32[1]{0}', space=sflag, size = 0x4, scoped, tag = 'scoped memory for tpu_custom_call.1']
    #allocation7 [shape = 'u8[131072]{0}', space=vmem, size = 0x20000, scoped, tag = 'output window, operand 0']
    %8 = vsyncpa [#allocation3], 0
    %s9 = scalar_lea.sflag [#allocation3], 1
    %10 = vsyncpa %s9, 0
    %11 = vsyncpa [#allocation6], 0
    %12 = vsyncpa [#allocation4], 0
    %s13 = scalar_lea.sflag [#allocation4], 1
    %14 = vsyncpa %s13, 0
    loop: start=0, step=1, limit=4
    $region2: #{tpu_custom_call.1} parent=1 // loop_pre_header
      _
    $region3: #{tpu_custom_call.1} parent=1 // loop_header
      %s16 = sphi 0, %s20
      %p17 = scmp.ge.s32.totalorder %s16, 4
      %s26 = sphi 0, %s28
      %s29 = sphi 0, %s26
      %s30 = sphi 0, %s29
      %s46 = sphi 0, %s30
      %s50 = sphi 0, %s50
      %s52 = sphi 0, %s50
      %s53 = sphi 0, %s52
      %s67 = sphi 0, %s53
      %s71 = sphi 0, %s71
      %s73 = sphi 0, %s71
      %s74 = sphi 0, %s73
      %s88 = sphi 0, %s74
      %s94 = sphi 0, %s96
      %s97 = sphi 0, %s94
      %s98 = sphi 0, %s97
      %s114 = sphi 0, %s98
    $region4: #{tpu_custom_call.1} parent=1 // loop_header_branch
      %19 = sbr.rel (%p17) target = $region8
    $region5: #{tpu_custom_call.1} parent=1 // loop_body
      %s21 = ssub.s32 %s16, 1
      %s22 = ssub.s32 %s16, 2
      %s23 = sadd.s32 %s16, 1
      %s24 = ssub.s32 %s16, %s23
      %p25 = scmp.eq.s32.totalorder %s24, 0
      %s27 = sadd.s32 %s26, 1
      %s28 = scalar_select %p25, %s26, %s27
      %p31 = pneg %p25
      %p32 = scmp.eq.s32.totalorder %s16, 1
      %p33 = por %p31, %p32
      %p34 = scmp.ne.s32.totalorder %s26, %s29
      %p35 = scmp.eq.s32.totalorder %s16, 0
      %p36 = por %p34, %p35
      %p37 = scmp.ne.s32.totalorder %s26, %s29
      %p38 = scmp.eq.s32.totalorder %s21, 1
      %p39 = por %p37, %p38
      %p40 = scmp.ne.s32.totalorder %s29, %s30
      %p41 = scmp.eq.s32.totalorder %s21, 0
      %p42 = por %p40, %p41
      %p43 = scmp.ne.s32.totalorder %s29, %s30
      %p44 = scmp.eq.s32.totalorder %s22, 1
      %p45 = por %p43, %p44
      %p47 = scmp.ne.s32.totalorder %s30, %s46
      %p48 = scmp.eq.s32.totalorder %s22, 0
      %p49 = por %p47, %p48
      %s51 = sadd.s32 %s50, 1
      %p54 = scmp.eq.s32.totalorder %s16, 1
      %p55 = scmp.ne.s32.totalorder %s50, %s52
      %p56 = scmp.eq.s32.totalorder %s16, 0
      %p57 = por %p55, %p56
      %p58 = scmp.ne.s32.totalorder %s50, %s52
      %p59 = scmp.eq.s32.totalorder %s21, 1
      %p60 = por %p58, %p59
      %p61 = scmp.ne.s32.totalorder %s52, %s53
      %p62 = scmp.eq.s32.totalorder %s21, 0
      %p63 = por %p61, %p62
      %p64 = scmp.ne.s32.totalorder %s52, %s53
      %p65 = scmp.eq.s32.totalorder %s22, 1
      %p66 = por %p64, %p65
      %p68 = scmp.ne.s32.totalorder %s53, %s67
      %p69 = scmp.eq.s32.totalorder %s22, 0
      %p70 = por %p68, %p69
      %s72 = sadd.s32 %s71, 1
      %p75 = scmp.eq.s32.totalorder %s16, 1
      %p76 = scmp.ne.s32.totalorder %s71, %s73
      %p77 = scmp.eq.s32.totalorder %s16, 0
      %p78 = por %p76, %p77
      %p79 = scmp.ne.s32.totalorder %s71, %s73
      %p80 = scmp.eq.s32.totalorder %s21, 1
      %p81 = por %p79, %p80
      %p82 = scmp.ne.s32.totalorder %s73, %s74
      %p83 = scmp.eq.s32.totalorder %s21, 0
      %p84 = por %p82, %p83
      %p85 = scmp.ne.s32.totalorder %s73, %s74
      %p86 = scmp.eq.s32.totalorder %s22, 1
      %p87 = por %p85, %p86
      %p89 = scmp.ne.s32.totalorder %s74, %s88
      %p90 = scmp.eq.s32.totalorder %s22, 0
      %p91 = por %p89, %p90
      %s92 = ssub.s32 %s16, %s23
      %p93 = scmp.eq.s32.totalorder %s92, 0
      %s95 = sadd.s32 %s94, 1
      %s96 = scalar_select %p93, %s94, %s95
      %p99 = pneg %p93
      %p100 = scmp.eq.s32.totalorder %s16, 1
      %p101 = por %p99, %p100
      %p102 = scmp.ne.s32.totalorder %s94, %s97
      %p103 = scmp.eq.s32.totalorder %s16, 0
      %p104 = por %p102, %p103
      %p105 = scmp.ne.s32.totalorder %s94, %s97
      %p106 = scmp.eq.s32.totalorder %s21, 1
      %p107 = por %p105, %p106
      %p108 = scmp.ne.s32.totalorder %s97, %s98
      %p109 = scmp.eq.s32.totalorder %s21, 0
      %p110 = por %p108, %p109
      %p111 = scmp.ne.s32.totalorder %s97, %s98
      %p112 = scmp.eq.s32.totalorder %s22, 1
      %p113 = por %p111, %p112
      %p115 = scmp.ne.s32.totalorder %s98, %s114
      %p116 = scmp.eq.s32.totalorder %s22, 0
      %p117 = por %p115, %p116
      %p118 = scmp.le.s32.totalorder 1, %s16
      %p119 = scmp.lt.s32.totalorder %s16, 3
      %p120 = pnand %p118, %p119
      %p121 = pneg %p120
      // Predicated region
      $region9: #{tpu_custom_call.1} parent=5 // pred_check
        _
      $region10: #{tpu_custom_call.1} parent=5 // pred_check_branch
        %123 = sbr.rel (%p120) target = $region12
      $region11: #{tpu_custom_call.1} parent=5 // pred_region
        %s124 = ssub.s32 %s16, 1
        // Predicated region
        $region13: #{tpu_custom_call.1} parent=11 // pred_check
          %p125 = pneg %p63
        $region14: #{tpu_custom_call.1} parent=11 // pred_check_branch
          %127 = sbr.rel (%p125) target = $region16
        $region15: #{tpu_custom_call.1} parent=11 // pred_region
          %129 = vsyncadd [#allocation6], 0
          %s130 = sshll.u32 %s1, 4
          %s131 = int_to_ptr.hbm [resolvable:$true] %s130
          %s132 = sshll.u32 [#allocation5], 4
          %s133 = int_to_ptr.vmem [resolvable:$true] %s132
          %138 = dma.hbm_to_vmem [thread:$0]  %s131, 1024, %s133, [#allocation6], 64, 64, 4
        $region16: #{tpu_custom_call.1} parent=11 // pred_fallthru
          _
        // Predicated region
        $region17: #{tpu_custom_call.1} parent=11 // pred_check
          %p139 = pneg %p84
        $region18: #{tpu_custom_call.1} parent=11 // pred_check_branch
          %141 = sbr.rel (%p139) target = $region20
        $region19: #{tpu_custom_call.1} parent=11 // pred_region
          _
        $region20: #{tpu_custom_call.1} parent=11 // pred_fallthru
          _
      $region12: #{tpu_custom_call.1} parent=5 // pred_fallthru
        _
      %p142 = scmp.lt.s32.totalorder %s16, 2
      // Predicated region
      $region21: #{tpu_custom_call.1} parent=5 // pred_check
        %p143 = pneg %p142
      $region22: #{tpu_custom_call.1} parent=5 // pred_check_branch
        %145 = sbr.rel (%p143) target = $region24
      $region23: #{tpu_custom_call.1} parent=5 // pred_region
        // Predicated region
        $region25: #{tpu_custom_call.1} parent=23 // pred_check
          %p146 = pneg %p36
        $region26: #{tpu_custom_call.1} parent=23 // pred_check_branch
          %148 = sbr.rel (%p146) target = $region28
        $region27: #{tpu_custom_call.1} parent=23 // pred_region
          %s149 = sand.u32 %s26, 1
          %s150 = scalar_lea.sflag [#allocation3], %s149
          %s151 = sand.u32 %s26, 1
          %s152 = smul.addr %s151, 128
          %s153 = scalar_lea.vmem [#allocation2], %s152
          %s154 = smul.u32 32, %s16
          %156 = vsyncadd %s150, 0
          %s157 = smul.addr %s154, 4
          %s158 = scalar_lea.hbm %s0, %s157
          %s159 = sshll.u32 %s158, 4
          %s160 = int_to_ptr.hbm [resolvable:$true] %s159
          %s161 = sshll.u32 %s153, 4
          %s162 = int_to_ptr.vmem [resolvable:$true] %s161
          %167 = dma.hbm_to_vmem [thread:$0]  %s160, 2048, %s162, %s150, 64, 64, 4
        $region28: #{tpu_custom_call.1} parent=23 // pred_fallthru
          _
      $region24: #{tpu_custom_call.1} parent=5 // pred_fallthru
        _
      %p168 = scmp.le.s32.totalorder 1, %s16
      %p169 = scmp.lt.s32.totalorder %s16, 3
      %p170 = pnand %p168, %p169
      %p171 = pneg %p170
      // Predicated region
      $region29: #{tpu_custom_call.1} parent=5 // pred_check
        _
      $region30: #{tpu_custom_call.1} parent=5 // pred_check_branch
        %173 = sbr.rel (%p170) target = $region32
      $region31: #{tpu_custom_call.1} parent=5 // pred_region
        %s174 = ssub.s32 %s16, 1
        %s175 = sand.u32 %s29, 1
        %s176 = scalar_lea.sflag [#allocation3], %s175
        %s177 = sand.u32 %s29, 1
        %s178 = smul.addr %s177, 128
        %s179 = scalar_lea.vmem [#allocation2], %s178
        // Predicated region
        $region33: #{tpu_custom_call.1} parent=31 // pred_check
          %p180 = pneg %p42
        $region34: #{tpu_custom_call.1} parent=31 // pred_check_branch
          %182 = sbr.rel (%p180) target = $region36
        $region35: #{tpu_custom_call.1} parent=31 // pred_region
          %184 = dma.done %s176, 2048
        $region36: #{tpu_custom_call.1} parent=31 // pred_fallthru
          _
        // Predicated region
        $region37: #{tpu_custom_call.1} parent=31 // pred_check
          %p185 = pneg %p63
        $region38: #{tpu_custom_call.1} parent=31 // pred_check_branch
          %187 = sbr.rel (%p185) target = $region40
        $region39: #{tpu_custom_call.1} parent=31 // pred_region
          %189 = dma.done [#allocation6], 1024
        $region40: #{tpu_custom_call.1} parent=31 // pred_fallthru
          _
        %s190 = sand.u32 %s29, 1
        %s191 = scalar_lea.sflag [#allocation3], %s190
        %s192 = sand.u32 %s29, 1
        %s193 = smul.addr %s192, 128
        %s194 = scalar_lea.vmem [#allocation2], %s193
        %p195 = pneg %p42
        %p196 = pneg %p39
        %p197 = pneg %p63
        %p198 = pneg %p60
        %p199 = pneg %p84
        %p200 = pneg %p81
        %p201 = pneg %p110
        %p202 = pneg %p107
        %s203 = sand.u32 %s97, 1
        %s204 = scalar_lea.sflag [#allocation4], %s203
        %s205 = sand.u32 %s97, 1
        %s206 = smul.addr %s205, 128
        %s207 = scalar_lea.vmem [#allocation7], %s206
        %s208 = smul.u32 32, %s21
        %s209 = smul.u32 32, %s21
        %v210 = vld [vmem:[%s179] sm:$0xf]
        %v211 = vld [vmem:[%s179 + $0x4] sm:$0xf]
        %v212 = vld [vmem:[%s179 + $0x8] sm:$0xf]
        %v213 = vld [vmem:[%s179 + $0xc] sm:$0xf]
        %v214 = vld [vmem:[%s179 + $0x10] sm:$0xf]
        %v215 = vld [vmem:[%s179 + $0x14] sm:$0xf]
        %v216 = vld [vmem:[%s179 + $0x18] sm:$0xf]
        %v217 = vld [vmem:[%s179 + $0x1c] sm:$0xf]
        %v218 = vld [vmem:[%s179 + $0x20] sm:$0xf]
        %v219 = vld [vmem:[%s179 + $0x24] sm:$0xf]
        %v220 = vld [vmem:[%s179 + $0x28] sm:$0xf]
        %v221 = vld [vmem:[%s179 + $0x2c] sm:$0xf]
        %v222 = vld [vmem:[%s179 + $0x30] sm:$0xf]
        %v223 = vld [vmem:[%s179 + $0x34] sm:$0xf]
        %v224 = vld [vmem:[%s179 + $0x38] sm:$0xf]
        %v225 = vld [vmem:[%s179 + $0x3c] sm:$0xf]
        %v226 = vld [vmem:[%s179 + $0x40] sm:$0xf]
        %v227 = vld [vmem:[%s179 + $0x44] sm:$0xf]
        %v228 = vld [vmem:[%s179 + $0x48] sm:$0xf]
        %v229 = vld [vmem:[%s179 + $0x4c] sm:$0xf]
        %v230 = vld [vmem:[%s179 + $0x50] sm:$0xf]
        %v231 = vld [vmem:[%s179 + $0x54] sm:$0xf]
        %v232 = vld [vmem:[%s179 + $0x58] sm:$0xf]
        %v233 = vld [vmem:[%s179 + $0x5c] sm:$0xf]
        %v234 = vld [vmem:[%s179 + $0x60] sm:$0xf]
        %v235 = vld [vmem:[%s179 + $0x64] sm:$0xf]
        %v236 = vld [vmem:[%s179 + $0x68] sm:$0xf]
        %v237 = vld [vmem:[%s179 + $0x6c] sm:$0xf]
        %v238 = vld [vmem:[%s179 + $0x70] sm:$0xf]
        %v239 = vld [vmem:[%s179 + $0x74] sm:$0xf]
        %v240 = vld [vmem:[%s179 + $0x78] sm:$0xf]
        %v241 = vld [vmem:[%s179 + $0x7c] sm:$0xf]
        %v242 = vld [vmem:[#allocation5] sm:$0xf]
        %v243 = vld [vmem:[#allocation5 + $0x4] sm:$0xf]
        %v244 = vld [vmem:[#allocation5 + $0x8] sm:$0xf]
        %v245 = vld [vmem:[#allocation5 + $0xc] sm:$0xf]
        %v246 = vld [vmem:[#allocation5 + $0x10] sm:$0xf]
        %v247 = vld [vmem:[#allocation5 + $0x14] sm:$0xf]
        %v248 = vld [vmem:[#allocation5 + $0x18] sm:$0xf]
        %v249 = vld [vmem:[#allocation5 + $0x1c] sm:$0xf]
        %v250 = vld [vmem:[#allocation5 + $0x20] sm:$0xf]
        %v251 = vld [vmem:[#allocation5 + $0x24] sm:$0xf]
        %v252 = vld [vmem:[#allocation5 + $0x28] sm:$0xf]
        %v253 = vld [vmem:[#allocation5 + $0x2c] sm:$0xf]
        %v254 = vld [vmem:[#allocation5 + $0x30] sm:$0xf]
        %v255 = vld [vmem:[#allocation5 + $0x34] sm:$0xf]
        %v256 = vld [vmem:[#allocation5 + $0x38] sm:$0xf]
        %v257 = vld [vmem:[#allocation5 + $0x3c] sm:$0xf]
        %v258 = vld [vmem:[%s2] sm:$0x1]
        %v260 = vperm.slane %v258, 0
        %v294 = vunpack.c.l.b16 %v210
        %v295 = vunpack.c.l.b16 %v211
        %v296 = vunpack.c.l.b16 %v212
        %v297 = vunpack.c.l.b16 %v213
        %v298 = vunpack.c.l.b16 %v214
        %v299 = vunpack.c.l.b16 %v215
        %v300 = vunpack.c.l.b16 %v216
        %v301 = vunpack.c.l.b16 %v217
        %v302 = vunpack.c.l.b16 %v218
        %v303 = vunpack.c.l.b16 %v219
        %v304 = vunpack.c.l.b16 %v220
        %v305 = vunpack.c.l.b16 %v221
        %v306 = vunpack.c.l.b16 %v222
        %v307 = vunpack.c.l.b16 %v223
        %v308 = vunpack.c.l.b16 %v224
        %v309 = vunpack.c.l.b16 %v225
        %v310 = vunpack.c.l.b16 %v226
        %v311 = vunpack.c.l.b16 %v227
        %v312 = vunpack.c.l.b16 %v228
        %v313 = vunpack.c.l.b16 %v229
        %v314 = vunpack.c.l.b16 %v230
        %v315 = vunpack.c.l.b16 %v231
        %v316 = vunpack.c.l.b16 %v232
        %v317 = vunpack.c.l.b16 %v233
        %v318 = vunpack.c.l.b16 %v234
        %v319 = vunpack.c.l.b16 %v235
        %v320 = vunpack.c.l.b16 %v236
        %v321 = vunpack.c.l.b16 %v237
        %v322 = vunpack.c.l.b16 %v238
        %v323 = vunpack.c.l.b16 %v239
        %v324 = vunpack.c.l.b16 %v240
        %v325 = vunpack.c.l.b16 %v241
        %v326 = vpack.c.b16 %v295, %v294
        %v327 = vpack.c.b16 %v297, %v296
        %v328 = vpack.c.b16 %v299, %v298
        %v329 = vpack.c.b16 %v301, %v300
        %v330 = vpack.c.b16 %v303, %v302
        %v331 = vpack.c.b16 %v305, %v304
        %v332 = vpack.c.b16 %v307, %v306
        %v333 = vpack.c.b16 %v309, %v308
        %v334 = vpack.c.b16 %v311, %v310
        %v335 = vpack.c.b16 %v313, %v312
        %v336 = vpack.c.b16 %v315, %v314
        %v337 = vpack.c.b16 %v317, %v316
        %v338 = vpack.c.b16 %v319, %v318
        %v339 = vpack.c.b16 %v321, %v320
        %v340 = vpack.c.b16 %v323, %v322
        %v341 = vpack.c.b16 %v325, %v324
        %v374 = vunpack.c.l.b16 %v242
        %v375 = vunpack.c.l.b16 %v243
        %v376 = vunpack.c.l.b16 %v244
        %v377 = vunpack.c.l.b16 %v245
        %v378 = vunpack.c.l.b16 %v246
        %v379 = vunpack.c.l.b16 %v247
        %v380 = vunpack.c.l.b16 %v248
        %v381 = vunpack.c.l.b16 %v249
        %v382 = vunpack.c.l.b16 %v250
        %v383 = vunpack.c.l.b16 %v251
        %v384 = vunpack.c.l.b16 %v252
        %v385 = vunpack.c.l.b16 %v253
        %v386 = vunpack.c.l.b16 %v254
        %v387 = vunpack.c.l.b16 %v255
        %v388 = vunpack.c.l.b16 %v256
        %v389 = vunpack.c.l.b16 %v257
        %v390 = vpack.c.b16 %v375, %v374
        %v391 = vpack.c.b16 %v377, %v376
        %v392 = vpack.c.b16 %v379, %v378
        %v393 = vpack.c.b16 %v381, %v380
        %v394 = vpack.c.b16 %v383, %v382
        %v395 = vpack.c.b16 %v385, %v384
        %v396 = vpack.c.b16 %v387, %v386
        %v397 = vpack.c.b16 %v389, %v388
        %406 = vmatpush.bf16.msra.mxu0 %v397
        %407 = vmatpush.bf16.msra.mxu0 %v396
        %408 = vmatpush.bf16.msra.mxu0 %v395
        %409 = vmatpush.bf16.msra.mxu0 %v394
        %410 = vmatpush.bf16.msra.mxu0 %v393
        %411 = vmatpush.bf16.msra.mxu0 %v392
        %412 = vmatpush.bf16.msra.mxu0 %v391
        %413 = vmatpush.bf16.msra.mxu0 %v390
        %414 = vmatmul.bf16.gmra.mxu0 %v326
        %v415 = vpop.f32.mrf.mxu0
        %v416 = vadd.f32 %v260, %v415
        %v417 = vpop.f32.mrf.mxu0
        %v418 = vadd.f32 %v260, %v417
        %419 = vmatmul.bf16.gmra.mxu0 %v327
        %v420 = vpop.f32.mrf.mxu0
        %v421 = vadd.f32 %v260, %v420
        %v422 = vpop.f32.mrf.mxu0
        %v423 = vadd.f32 %v260, %v422
        %424 = vmatmul.bf16.gmra.mxu0 %v328
        %v425 = vpop.f32.mrf.mxu0
        %v426 = vadd.f32 %v260, %v425
        %v427 = vpop.f32.mrf.mxu0
        %v428 = vadd.f32 %v260, %v427
        %429 = vmatmul.bf16.gmra.mxu0 %v329
        %v430 = vpop.f32.mrf.mxu0
        %v431 = vadd.f32 %v260, %v430
        %v432 = vpop.f32.mrf.mxu0
        %v433 = vadd.f32 %v260, %v432
        %434 = vmatmul.bf16.gmra.mxu0 %v330
        %v435 = vpop.f32.mrf.mxu0
        %v436 = vadd.f32 %v260, %v435
        %v437 = vpop.f32.mrf.mxu0
        %v438 = vadd.f32 %v260, %v437
        %439 = vmatmul.bf16.gmra.mxu0 %v331
        %v440 = vpop.f32.mrf.mxu0
        %v441 = vadd.f32 %v260, %v440
        %v442 = vpop.f32.mrf.mxu0
        %v443 = vadd.f32 %v260, %v442
        %444 = vmatmul.bf16.gmra.mxu0 %v332
        %v445 = vpop.f32.mrf.mxu0
        %v446 = vadd.f32 %v260, %v445
        %v447 = vpop.f32.mrf.mxu0
        %v448 = vadd.f32 %v260, %v447
        %449 = vmatmul.bf16.gmra.mxu0 %v333
        %v450 = vpop.f32.mrf.mxu0
        %v451 = vadd.f32 %v260, %v450
        %v452 = vpop.f32.mrf.mxu0
        %v453 = vadd.f32 %v260, %v452
        %454 = vmatmul.bf16.gmra.mxu0 %v334
        %v455 = vpop.f32.mrf.mxu0
        %v456 = vadd.f32 %v260, %v455
        %v457 = vpop.f32.mrf.mxu0
        %v458 = vadd.f32 %v260, %v457
        %459 = vmatmul.bf16.gmra.mxu0 %v335
        %v460 = vpop.f32.mrf.mxu0
        %v461 = vadd.f32 %v260, %v460
        %v462 = vpop.f32.mrf.mxu0
        %v463 = vadd.f32 %v260, %v462
        %464 = vmatmul.bf16.gmra.mxu0 %v336
        %v465 = vpop.f32.mrf.mxu0
        %v466 = vadd.f32 %v260, %v465
        %v467 = vpop.f32.mrf.mxu0
        %v468 = vadd.f32 %v260, %v467
        %469 = vmatmul.bf16.gmra.mxu0 %v337
        %v470 = vpop.f32.mrf.mxu0
        %v471 = vadd.f32 %v260, %v470
        %v472 = vpop.f32.mrf.mxu0
        %v473 = vadd.f32 %v260, %v472
        %474 = vmatmul.bf16.gmra.mxu0 %v338
        %v475 = vpop.f32.mrf.mxu0
        %v476 = vadd.f32 %v260, %v475
        %v477 = vpop.f32.mrf.mxu0
        %v478 = vadd.f32 %v260, %v477
        %479 = vmatmul.bf16.gmra.mxu0 %v339
        %v480 = vpop.f32.mrf.mxu0
        %v481 = vadd.f32 %v260, %v480
        %v482 = vpop.f32.mrf.mxu0
        %v483 = vadd.f32 %v260, %v482
        %484 = vmatmul.bf16.gmra.mxu0 %v340
        %v485 = vpop.f32.mrf.mxu0
        %v486 = vadd.f32 %v260, %v485
        %v487 = vpop.f32.mrf.mxu0
        %v488 = vadd.f32 %v260, %v487
        %489 = vmatmul.bf16.gmra.mxu0 %v341
        %v490 = vpop.f32.mrf.mxu0
        %v491 = vadd.f32 %v260, %v490
        %v492 = vpop.f32.mrf.mxu0
        %v493 = vadd.f32 %v260, %v492
        %494 = vdwg.mxu0
        %v495 = vmax.f32 %v416, 0.0
        %v496 = vmax.f32 %v418, 0.0
        %v497 = vmax.f32 %v421, 0.0
        %v498 = vmax.f32 %v423, 0.0
        %v499 = vmax.f32 %v426, 0.0
        %v500 = vmax.f32 %v428, 0.0
        %v501 = vmax.f32 %v431, 0.0
        %v502 = vmax.f32 %v433, 0.0
        %v503 = vmax.f32 %v436, 0.0
        %v504 = vmax.f32 %v438, 0.0
        %v505 = vmax.f32 %v441, 0.0
        %v506 = vmax.f32 %v443, 0.0
        %v507 = vmax.f32 %v446, 0.0
        %v508 = vmax.f32 %v448, 0.0
        %v509 = vmax.f32 %v451, 0.0
        %v510 = vmax.f32 %v453, 0.0
        %v511 = vmax.f32 %v456, 0.0
        %v512 = vmax.f32 %v458, 0.0
        %v513 = vmax.f32 %v461, 0.0
        %v514 = vmax.f32 %v463, 0.0
        %v515 = vmax.f32 %v466, 0.0
        %v516 = vmax.f32 %v468, 0.0
        %v517 = vmax.f32 %v471, 0.0
        %v518 = vmax.f32 %v473, 0.0
        %v519 = vmax.f32 %v476, 0.0
        %v520 = vmax.f32 %v478, 0.0
        %v521 = vmax.f32 %v481, 0.0
        %v522 = vmax.f32 %v483, 0.0
        %v523 = vmax.f32 %v486, 0.0
        %v524 = vmax.f32 %v488, 0.0
        %v525 = vmax.f32 %v491, 0.0
        %v526 = vmax.f32 %v493, 0.0
        %v527 = vpack.c.bf16 %v495, %v495
        %v528 = vpack.c.bf16 %v496, %v496
        %v529 = vpack.c.bf16 %v497, %v497
        %v530 = vpack.c.bf16 %v498, %v498
        %v531 = vpack.c.bf16 %v499, %v499
        %v532 = vpack.c.bf16 %v500, %v500
        %v533 = vpack.c.bf16 %v501, %v501
        %v534 = vpack.c.bf16 %v502, %v502
        %v535 = vpack.c.bf16 %v503, %v503
        %v536 = vpack.c.bf16 %v504, %v504
        %v537 = vpack.c.bf16 %v505, %v505
        %v538 = vpack.c.bf16 %v506, %v506
        %v539 = vpack.c.bf16 %v507, %v507
        %v540 = vpack.c.bf16 %v508, %v508
        %v541 = vpack.c.bf16 %v509, %v509
        %v542 = vpack.c.bf16 %v510, %v510
        %v543 = vpack.c.bf16 %v511, %v511
        %v544 = vpack.c.bf16 %v512, %v512
        %v545 = vpack.c.bf16 %v513, %v513
        %v546 = vpack.c.bf16 %v514, %v514
        %v547 = vpack.c.bf16 %v515, %v515
        %v548 = vpack.c.bf16 %v516, %v516
        %v549 = vpack.c.bf16 %v517, %v517
        %v550 = vpack.c.bf16 %v518, %v518
        %v551 = vpack.c.bf16 %v519, %v519
        %v552 = vpack.c.bf16 %v520, %v520
        %v553 = vpack.c.bf16 %v521, %v521
        %v554 = vpack.c.bf16 %v522, %v522
        %v555 = vpack.c.bf16 %v523, %v523
        %v556 = vpack.c.bf16 %v524, %v524
        %v557 = vpack.c.bf16 %v525, %v525
        %v558 = vpack.c.bf16 %v526, %v526
        %559 = vst [vmem:[%s207] sm:$0xf] %v527
        %560 = vst [vmem:[%s207 + $0x4] sm:$0xf] %v528
        %561 = vst [vmem:[%s207 + $0x8] sm:$0xf] %v529
        %562 = vst [vmem:[%s207 + $0xc] sm:$0xf] %v530
        %563 = vst [vmem:[%s207 + $0x10] sm:$0xf] %v531
        %564 = vst [vmem:[%s207 + $0x14] sm:$0xf] %v532
        %565 = vst [vmem:[%s207 + $0x18] sm:$0xf] %v533
        %566 = vst [vmem:[%s207 + $0x1c] sm:$0xf] %v534
        %567 = vst [vmem:[%s207 + $0x20] sm:$0xf] %v535
        %568 = vst [vmem:[%s207 + $0x24] sm:$0xf] %v536
        %569 = vst [vmem:[%s207 + $0x28] sm:$0xf] %v537
        %570 = vst [vmem:[%s207 + $0x2c] sm:$0xf] %v538
        %571 = vst [vmem:[%s207 + $0x30] sm:$0xf] %v539
        %572 = vst [vmem:[%s207 + $0x34] sm:$0xf] %v540
        %573 = vst [vmem:[%s207 + $0x38] sm:$0xf] %v541
        %574 = vst [vmem:[%s207 + $0x3c] sm:$0xf] %v542
        %575 = vst [vmem:[%s207 + $0x40] sm:$0xf] %v543
        %576 = vst [vmem:[%s207 + $0x44] sm:$0xf] %v544
        %577 = vst [vmem:[%s207 + $0x48] sm:$0xf] %v545
        %578 = vst [vmem:[%s207 + $0x4c] sm:$0xf] %v546
        %579 = vst [vmem:[%s207 + $0x50] sm:$0xf] %v547
        %580 = vst [vmem:[%s207 + $0x54] sm:$0xf] %v548
        %581 = vst [vmem:[%s207 + $0x58] sm:$0xf] %v549
        %582 = vst [vmem:[%s207 + $0x5c] sm:$0xf] %v550
        %583 = vst [vmem:[%s207 + $0x60] sm:$0xf] %v551
        %584 = vst [vmem:[%s207 + $0x64] sm:$0xf] %v552
        %585 = vst [vmem:[%s207 + $0x68] sm:$0xf] %v553
        %586 = vst [vmem:[%s207 + $0x6c] sm:$0xf] %v554
        %587 = vst [vmem:[%s207 + $0x70] sm:$0xf] %v555
        %588 = vst [vmem:[%s207 + $0x74] sm:$0xf] %v556
        %589 = vst [vmem:[%s207 + $0x78] sm:$0xf] %v557
        %590 = vst [vmem:[%s207 + $0x7c] sm:$0xf] %v558
        %s591 = sand.u32 %s97, 1
        %s592 = scalar_lea.sflag [#allocation4], %s591
        %s593 = sand.u32 %s97, 1
        %s594 = smul.addr %s593, 128
        %s595 = scalar_lea.vmem [#allocation7], %s594
        // Predicated region
        $region41: #{tpu_custom_call.1} parent=31 // pred_check
          %p596 = pneg %p107
        $region42: #{tpu_custom_call.1} parent=31 // pred_check_branch
          %598 = sbr.rel (%p596) target = $region44
        $region43: #{tpu_custom_call.1} parent=31 // pred_region
          %s599 = smul.u32 32, %s21
          %601 = vsyncadd %s592, 0
          %s602 = smul.addr %s599, 4
          %s603 = scalar_lea.hbm %s3, %s602
          %s604 = sshll.u32 %s595, 4
          %s605 = int_to_ptr.vmem [resolvable:$true] %s604
          %s606 = sshll.u32 %s603, 4
          %s607 = int_to_ptr.hbm [resolvable:$true] %s606
          %612 = dma.vmem_to_hbm [thread:$0]  %s605, 2048, %s607, %s592, 64, 64, 4
        $region44: #{tpu_custom_call.1} parent=31 // pred_fallthru
          _
      $region32: #{tpu_custom_call.1} parent=5 // pred_fallthru
        _
      %p613 = scmp.le.s32.totalorder 2, %s16
      // Predicated region
      $region45: #{tpu_custom_call.1} parent=5 // pred_check
        %p614 = pneg %p613
      $region46: #{tpu_custom_call.1} parent=5 // pred_check_branch
        %616 = sbr.rel (%p614) target = $region48
      $region47: #{tpu_custom_call.1} parent=5 // pred_region
        %s617 = ssub.s32 %s16, 2
        // Predicated region
        $region49: #{tpu_custom_call.1} parent=47 // pred_check
          %p618 = pneg %p113
        $region50: #{tpu_custom_call.1} parent=47 // pred_check_branch
          %620 = sbr.rel (%p618) target = $region52
        $region51: #{tpu_custom_call.1} parent=47 // pred_region
          %s621 = sand.u32 %s98, 1
          %s622 = scalar_lea.sflag [#allocation4], %s621
          %s623 = sand.u32 %s98, 1
          %s624 = smul.addr %s623, 128
          %s625 = scalar_lea.vmem [#allocation7], %s624
          %627 = dma.done %s622, 2048
        $region52: #{tpu_custom_call.1} parent=47 // pred_fallthru
          _
      $region48: #{tpu_custom_call.1} parent=5 // pred_fallthru
        _
    $region6: #{tpu_custom_call.1} parent=1 // loop_footer
      %s20 = sadd.s32 1, %s16
    $region7: #{tpu_custom_call.1} parent=1 // loop_footer_branch
      %15 = sbr.rel target = $region3
    $region8: #{tpu_custom_call.1} parent=1 // loop_exit
      _
    %628 = vsyncpa [#allocation3], 1
    %s629 = scalar_lea.sflag [#allocation3], 1
    %630 = vsyncpa %s629, 1
    %631 = vsyncpa [#allocation6], 1
    %632 = vsyncpa [#allocation4], 1
    %s633 = scalar_lea.sflag [#allocation4], 1
    %634 = vsyncpa %s633, 1

</llo_original>
